<compile_context>
chip_gen: v7x
topology: tpu7x:2x2x1
jax: 0.10.0
libtpu: 0.0.40
codegen_flags: <defaults>
</compile_context>

<pallas_src>
from functools import lru_cache

import numpy as np
import jax
import jax.numpy as jnp
from jax import lax
from jax.experimental import pallas as pl
from jax.experimental.pallas import tpu as pltpu


# --------------------------------------------------------------------------- helpers
def _round_up(n: int, m: int) -> int:
    return ((n + m - 1) // m) * m


def _vmem_capacity_bytes() -> int:
    try:
        return int(pltpu.get_tpu_info().vmem_capacity_bytes)
    except Exception:
        return 64 << 20  # conservative fallback (v7x physical VMEM per TC)


def _small_mxu() -> bool:
    """True on <=v5 chips (128-wide MXU); v6e/v7x have 256-wide MXUs."""
    try:
        kind = jax.devices()[0].device_kind.lower()
    except Exception:
        return False
    return any(t in kind for t in ("v2", "v3", "v4", "v5"))


@lru_cache(maxsize=32)
def _pool_constants(L: int, D: int, tk: int, tn: int):
    """Host-built, shape-cached pooling constants.

    Returns:
      w01   : (L_w, D_pad) bf16 0/1 band indicator (exact; padded rows/cols 0).
      inv   : (1, D_pad)   f32 per-bin 1/width (0 in padded columns).
      koff  : (D_pad//tn,) int32 starting K-block offset of each n tile's band.
      K_grid: number of K blocks covering the widest band.
    """
    L_w = _round_up(L, tk)
    D_pad = _round_up(D, tn)
    grid_n = D_pad // tn

    cols = np.arange(D_pad, dtype=np.int64)
    starts = np.where(cols < D, (cols * L) // D, L_w)
    ends = np.where(cols < D, -((-(cols + 1) * L) // D), L_w)  # ceil((c+1)*L/D)

    rows = np.arange(L_w, dtype=np.int64)[:, None]
    w01 = ((rows >= starts[None, :]) & (rows < ends[None, :])).astype(np.float32)

    inv = np.zeros((1, D_pad), dtype=np.float32)
    inv[0, :D] = 1.0 / (ends[:D] - starts[:D]).astype(np.float32)

    koff = np.zeros((grid_n,), dtype=np.int64)
    kblk = np.ones((grid_n,), dtype=np.int64)
    for nb in range(grid_n):
        c0 = nb * tn
        if c0 >= D:
            continue  # padding-only tile: all-zero W columns, result discarded
        c1 = min((nb + 1) * tn, D) - 1
        s_row = int(starts[c0])
        e_row = int(ends[c1])
        koff[nb] = s_row // tk
        kblk[nb] = -(-(e_row - koff[nb] * tk) // tk)
    K_grid = int(max(int(kblk.max()), 1))
    # Clamp so every tile's K window stays inside the L_w//tk stored blocks.
    # Extra leading rows are exact: their W entries are 0 and x there is real data.
    koff = np.clip(koff, 0, L_w // tk - K_grid).astype(np.int32)

    return (jnp.asarray(w01, dtype=jnp.bfloat16),
            jnp.asarray(inv),
            jnp.asarray(koff),
            K_grid)


# --------------------------------------------------------------------------- kernel
def _make_pool_kernel(L: int, tk: int, needs_mask: bool, resident_w: bool):
    """Banded pooling matmul:  out = (x @ W01) * inv_width  (f32 accumulation)."""

    def kernel(koff_ref, x_ref, w_ref, inv_ref, o_ref, acc_ref):
        n = pl.program_id(0)
        k = pl.program_id(2)

        @pl.when(k == 0)
        def _init():
            acc_ref[...] = jnp.zeros_like(acc_ref)

        x = x_ref[...].astype(jnp.float32)

        if needs_mask or resident_w:
            base = (koff_ref[n] + k) * tk  # global row offset of this K block

        if needs_mask:
            # Zero columns past the true L (edge K block reads an unpadded x).
            col = lax.broadcasted_iota(jnp.int32, x.shape, 1)
            x = jnp.where(col < (L - base), x, 0.0)

        if resident_w:
            # W column stripe (L_w, tn) is resident in VMEM; slice the band block.
            w = w_ref[pl.ds(pl.multiple_of(base, tk), tk), :]
        else:
            w = w_ref[...]

        acc_ref[...] += jnp.dot(x, w.astype(jnp.float32),
                                preferred_element_type=jnp.float32)

        @pl.when(k == pl.num_programs(2) - 1)
        def _finalize():
            o_ref[...] = (acc_ref[...] * inv_ref[...]).astype(o_ref.dtype)

    return kernel


# --------------------------------------------------------------------------- wrapper
def mean_mapper(features: jax.Array, preprocessing_dim: int, *, w_resident=None) -> jax.Array:
    """Pallas implementation of MeanMapper.forward.

    features: any shape with leading batch dim B (e.g. NCHW); flattened to (B, L).
    returns : (B, preprocessing_dim), same dtype as the input.
    """
    B = int(features.shape[0])
    x = features.reshape(B, -1)
    L = int(x.shape[1])
    D = int(preprocessing_dim)
    out_dtype = x.dtype
    x_bytes = jnp.dtype(x.dtype).itemsize
    o_bytes = jnp.dtype(out_dtype).itemsize

    # ---- generation-aware budgets / tile sizes --------------------------------
    cap = _vmem_capacity_bytes()
    budget = min(max(cap // 2, 16 << 20), 48 << 20)

    tn = 128 if (_small_mxu() or D <= 128) else 256       # match MXU width
    tk = min(512, _round_up(L, 128))
    L_w = _round_up(L, tk)
    D_pad = _round_up(D, tn)
    grid_n = D_pad // tn

    # W layout: VMEM-resident column stripe (read once) vs streamed banded blocks.
    stripe_bytes = 2 * L_w * tn * 2                        # double-buffered bf16
    if w_resident is None:
        resident_w = stripe_bytes <= max(budget // 3, 4 << 20)
    else:
        resident_w = bool(w_resident)
    w_buf_bytes = stripe_bytes if resident_w else 2 * tk * tn * 2
    fixed = w_buf_bytes + 2 * tn * 4                       # + inv block (double buffered)

    tm = 8
    for cand in (1024, 512, 256, 128, 64, 32, 16, 8):
        if cand > max(_round_up(B, 8), 8):
            continue
        per = 2 * cand * tk * x_bytes + 2 * cand * tn * o_bytes + cand * tn * 4
        if fixed + per <= budget:
            tm = cand
            break
    # v7x megacore: keep >= 2 steps on some "parallel" axis when possible.
    if grid_n == 1 and pl.cdiv(B, tm) == 1 and B > 8:
        tm = max(8, _round_up(pl.cdiv(B, 2), 8))
    grid_m = pl.cdiv(B, tm)

    w01, inv, koff, K_grid = _pool_constants(L, D, tk, tn)
    grid = (grid_n, grid_m, K_grid)

    footprint = fixed + 2 * tm * tk * x_bytes + 2 * tm * tn * o_bytes + tm * tn * 4
    vmem_limit = int(min(max(cap - (8 << 20), 16 << 20),
                         max(2 * footprint + (8 << 20), 32 << 20)))

    if resident_w:
        w_spec = pl.BlockSpec((L_w, tn), lambda n, m, k, koff_r: (0, n))
    else:
        w_spec = pl.BlockSpec((tk, tn), lambda n, m, k, koff_r: (koff_r[n] + k, n))

    kernel = _make_pool_kernel(L, tk,
                               needs_mask=(L % tk != 0),
                               resident_w=resident_w)

    return pl.pallas_call(
        kernel,
        out_shape=jax.ShapeDtypeStruct((B, D), out_dtype),
        grid_spec=pltpu.PrefetchScalarGridSpec(
            num_scalar_prefetch=1,
            grid=grid,
            in_specs=[
                pl.BlockSpec((tm, tk), lambda n, m, k, koff_r: (m, koff_r[n] + k)),
                w_spec,
                pl.BlockSpec((1, tn), lambda n, m, k, koff_r: (0, n)),
            ],
            out_specs=pl.BlockSpec((tm, tn), lambda n, m, k, koff_r: (m, n)),
            scratch_shapes=[pltpu.VMEM((tm, tn), jnp.float32)],
        ),
        compiler_params=pltpu.CompilerParams(
            dimension_semantics=("parallel", "parallel", "arbitrary"),
            vmem_limit_bytes=vmem_limit,
        ),
        cost_estimate=pl.CostEstimate(
            flops=2 * grid_n * grid_m * K_grid * tm * tk * tn,
            transcendentals=0,
            bytes_accessed=B * L * x_bytes + L_w * D_pad * 2 + B * D * o_bytes,
        ),
    )(koff, x, w01, inv)


# --------------------------------------------------------------------------- reference
def _reference(features: jax.Array, preprocessing_dim: int) -> jax.Array:
    """Pure-JAX reference of F.adaptive_avg_pool1d semantics (integer boundaries)."""
    B = features.shape[0]
    x = features.reshape(B, -1).astype(jnp.float32)
    L = x.shape[1]
    D = preprocessing_dim
    outs = []
    for i in range(D):
        s = (i * L) // D
        e = -((-(i + 1) * L) // D)
        outs.append(jnp.mean(x[:, s:e], axis=1))
    return jnp.stack(outs, axis=1)


# --------------------------------------------------------------------------- demo
if __name__ == "__main__":
    key = jax.random.PRNGKey(0)

    cases = [
        # (shape, D, kwargs)
        ((2, 4, 16, 16), 32, {}),                       # D | L, resident W, no edge mask
        ((2, 4, 16, 16), 24, {}),                       # D !| L, resident W, no edge mask
        ((4, 3, 5, 7), 16, {"w_resident": False}),      # streamed W + ragged-K-edge mask
        ((4, 3, 5, 7), 16, {"w_resident": True}),       # resident W + ragged-K-edge mask
        ((2, 4, 16, 16), 32, {"w_resident": False}),    # streamed W, no edge mask
    ]

    for i, (shape, dim, kw) in enumerate(cases):
        k = jax.random.fold_in(key, i)
        xin = jax.random.normal(k, shape, dtype=jnp.float32)
        out = jax.block_until_ready(mean_mapper(xin, dim, **kw))
        ref = _reference(xin, dim)
        assert out.shape == (shape[0], dim), (out.shape, shape, dim)
        assert jnp.allclose(out, ref, atol=1e-5, rtol=1e-5), f"mismatch in case {i}"

    print("KERNEL_OK")
</pallas_src>

<mosaic_0001>
module attributes {stable_mosaic.version = 11 : i64} {
  func.func @kernel(%arg0: i32, %arg1: i32, %arg2: i32, %arg3: memref<1xi32, #tpu.memory_space<smem>>, %arg4: memref<8x512xf32, #tpu.memory_space<vmem>>, %arg5: memref<1024x128xbf16, #tpu.memory_space<vmem>>, %arg6: memref<1x128xf32, #tpu.memory_space<vmem>>, %arg7: memref<8x128xf32, #tpu.memory_space<vmem>>, %arg8: memref<8x128xf32, #tpu.memory_space<vmem>>) attributes {dimension_semantics = [#tpu.dimension_semantics<parallel>, #tpu.dimension_semantics<parallel>, #tpu.dimension_semantics<arbitrary>], iteration_bounds = array<i64: 1, 1, 2>, scalar_prefetch = 1 : i64, scratch_operands = 1 : i64, tpu.core_type = #tpu.core_type<tc>, window_params = [{transform_indices = @transform_0, window_bounds = array<i64: 8, 512>}, {transform_indices = @transform_1, window_bounds = array<i64: 1024, 128>}, {transform_indices = @transform_2, window_bounds = array<i64: 1, 128>}, {transform_indices = @transform_3, window_bounds = array<i64: 8, 128>}]} {
    %c0_i32 = arith.constant 0 : i32
    %0 = arith.cmpi eq, %arg2, %c0_i32 : i32
    %1 = arith.extui %0 : i1 to i32
    %c0_i32_0 = arith.constant 0 : i32
    %2 = arith.cmpi ne, %1, %c0_i32_0 : i32
    scf.if %2 {
      %cst_8 = arith.constant 0.000000e+00 : f32
      %19 = vector.broadcast %cst_8 : f32 to vector<8x128xf32>
      %c0_9 = arith.constant 0 : index
      %c0_10 = arith.constant 0 : index
      %20 = vector.load %arg8[%c0_9, %c0_10] : memref<8x128xf32, #tpu.memory_space<vmem>>, vector<8x128xf32>
      tpu.vector_store %arg8[%c0_9, %c0_10], %19 {strides = array<i32>} : memref<8x128xf32, #tpu.memory_space<vmem>>, vector<8x128xf32>,
    } else {
    }
    %c0 = arith.constant 0 : index
    %c0_1 = arith.constant 0 : index
    %3 = vector.load %arg4[%c0, %c0_1] : memref<8x512xf32, #tpu.memory_space<vmem>>, vector<8x512xf32>
    %4 = arith.index_cast %arg0 : i32 to index
    %5 = memref.load %arg3[%4] : memref<1xi32, #tpu.memory_space<smem>>
    %6 = arith.addi %5, %arg2 : i32
    %c512_i32 = arith.constant 512 : i32
    %7 = arith.muli %6, %c512_i32 : i32
    %8 = tpu.assume_multiple %7, 512 : i32
    %9 = arith.index_cast %8 : i32 to index
    %c0_2 = arith.constant 0 : index
    %10 = vector.load %arg5[%9, %c0_2] : memref<1024x128xbf16, #tpu.memory_space<vmem>>, vector<512x128xbf16>
    %c0_3 = arith.constant 0 : index
    %c0_4 = arith.constant 0 : index
    %11 = vector.load %arg8[%c0_3, %c0_4] : memref<8x128xf32, #tpu.memory_space<vmem>>, vector<8x128xf32>
    %12 = arith.extf %10 : vector<512x128xbf16> to vector<512x128xf32>
    %cst = arith.constant dense<0.000000e+00> : vector<8x128xf32>
    %13 = tpu.matmul %3, %12, %cst {dimension_numbers = #tpu.dot_dimension_numbers<[1], [0], [0], [1], [0, 0, 1, 1], [], []>} : vector<8x512xf32>, vector<512x128xf32>, vector<8x128xf32> -> vector<8x128xf32>
    %14 = arith.addf %11, %13 : vector<8x128xf32>
    %c0_5 = arith.constant 0 : index
    %c0_6 = arith.constant 0 : index
    %15 = vector.load %arg8[%c0_5, %c0_6] : memref<8x128xf32, #tpu.memory_space<vmem>>, vector<8x128xf32>
    tpu.vector_store %arg8[%c0_5, %c0_6], %14 {strides = array<i32>} : memref<8x128xf32, #tpu.memory_space<vmem>>, vector<8x128xf32>,
    %c1_i32 = arith.constant 1 : i32
    %16 = arith.cmpi eq, %arg2, %c1_i32 : i32
    %17 = arith.extui %16 : i1 to i32
    %c0_i32_7 = arith.constant 0 : i32
    %18 = arith.cmpi ne, %17, %c0_i32_7 : i32
    scf.if %18 {
      %c0_8 = arith.constant 0 : index
      %c0_9 = arith.constant 0 : index
      %19 = vector.load %arg8[%c0_8, %c0_9] : memref<8x128xf32, #tpu.memory_space<vmem>>, vector<8x128xf32>
      %c0_10 = arith.constant 0 : index
      %c0_11 = arith.constant 0 : index
      %20 = vector.load %arg6[%c0_10, %c0_11] : memref<1x128xf32, #tpu.memory_space<vmem>>, vector<1x128xf32>
      %21 = vector.broadcast %20 : vector<1x128xf32> to vector<8x128xf32>
      %22 = arith.mulf %19, %21 : vector<8x128xf32>
      %c0_12 = arith.constant 0 : index
      %c0_13 = arith.constant 0 : index
      %23 = vector.load %arg7[%c0_12, %c0_13] : memref<8x128xf32, #tpu.memory_space<vmem>>, vector<8x128xf32>
      tpu.vector_store %arg7[%c0_12, %c0_13], %22 {strides = array<i32>} : memref<8x128xf32, #tpu.memory_space<vmem>>, vector<8x128xf32>,
    } else {
    }
    return
  }
  func.func @transform_0(%arg0: i32, %arg1: i32, %arg2: i32, %arg3: memref<1xi32, #tpu.memory_space<smem>>) -> (i32, i32) {
    %0 = arith.index_cast %arg0 : i32 to index
    %1 = memref.load %arg3[%0] : memref<1xi32, #tpu.memory_space<smem>>
    %2 = arith.addi %1, %arg2 : i32
    %c0_i32 = arith.constant 0 : i32
    return %arg1, %2 : i32, i32
  }
  func.func @transform_1(%arg0: i32, %arg1: i32, %arg2: i32, %arg3: memref<1xi32, #tpu.memory_space<smem>>) -> (i32, i32) {
    %c0_i32 = arith.constant 0 : i32
    %c0_i32_0 = arith.constant 0 : i32
    return %c0_i32, %arg0 : i32, i32
  }
  func.func @transform_2(%arg0: i32, %arg1: i32, %arg2: i32, %arg3: memref<1xi32, #tpu.memory_space<smem>>) -> (i32, i32) {
    %c0_i32 = arith.constant 0 : i32
    %c0_i32_0 = arith.constant 0 : i32
    return %c0_i32, %arg0 : i32, i32
  }
  func.func @transform_3(%arg0: i32, %arg1: i32, %arg2: i32, %arg3: memref<1xi32, #tpu.memory_space<smem>>) -> (i32, i32) {
    %c0_i32 = arith.constant 0 : i32
    return %arg1, %arg0 : i32, i32
  }
}

</mosaic_0001>

<llo_original>
// kernel: tpu_custom_call.1
$region0: #{tpu_custom_call.1}
  #allocation0 [shape = 'u32[]', space=smem, size = 0x4, offset = 0x4, fixed_abs, tag = 'smem constant byte address 0x4 - core index']
  #allocation1 [shape = 'u32[144,128]{1,0:T(1,128)}', space=vmem, size = 0x12000, scoped, tag = 'internal scratch']
  #allocation2 [shape = 'f32[8,128]{1,0:T(8,128)}', space=vmem, size = 0x1000, scoped, tag = 'scratch operand']
  #allocation3 [shape = 's32[1]{0}', space=sflag, size = 0x4, scoped, tag = 'scoped memory for tpu_custom_call.1']
  #allocation4 [shape = 's32[1]{0:T(128)S(6)}', space=smem, size = 0x200, scoped, tag = 'prefetched SMEM operand 0']
  %s0 = inlined_call_operand.<no memory space> [shape: s32[1], index: 0, kind: input, shape index: {}]
  %s1 = inlined_call_operand.hbm [shape: f32[2,1024], index: 1, kind: input, shape index: {}]
  %s2 = inlined_call_operand.hbm [shape: bf16[1024,128], index: 2, kind: input, shape index: {}]
  %s3 = inlined_call_operand.vmem [shape: f32[1,128], index: 3, kind: input, shape index: {}]
  %s4 = inlined_call_operand.hbm [shape: f32[2,32], index: 4, kind: output, shape index: {}]
  %s5 = sld [smem:[#allocation0]]
  $region61: #{tpu_custom_call.1} parent=0
    _
  %s7 = ssub.s32 1, %s5
  %s8 = scalar_select 0, %s7, %s5
  %9 = sst [smem:[#allocation4]] %s0
  $region1: #{tpu_custom_call.1} parent=0
    #allocation5 [shape = 'u8[32768]{0}', space=vmem, size = 0x8000, scoped, tag = 'input window, operand 1']
    #allocation6 [shape = 's32[2]{0}', space=sflag, size = 0x8, scoped, tag = 'scoped memory for tpu_custom_call.1']
    #allocation7 [shape = 's32[2]{0}', space=sflag, size = 0x8, scoped, tag = 'scoped memory for tpu_custom_call.1']
    #allocation8 [shape = 'u8[262144]{0}', space=vmem, size = 0x40000, scoped, tag = 'input window, operand 2, single buffered']
    #allocation9 [shape = 's32[1]{0}', space=sflag, size = 0x4, scoped, tag = 'scoped memory for tpu_custom_call.1']
    #allocation10 [shape = 'u8[4096]{0}', space=vmem, size = 0x1000, scoped, tag = 'output window, operand 0, single buffered']
    %10 = vsyncpa [#allocation6], 0
    %s11 = scalar_lea.sflag [#allocation6], 1
    %12 = vsyncpa %s11, 0
    %13 = vsyncpa [#allocation9], 0
    %14 = vsyncpa [#allocation7], 0
    loop: start=0, step=1, limit=4
    $region2: #{tpu_custom_call.1} parent=1 // loop_pre_header
      _
    $region3: #{tpu_custom_call.1} parent=1 // loop_header
      %s16 = sphi 0, %s20
      %p17 = scmp.ge.s32.totalorder %s16, 4
      %s23 = sphi 0, %s42
      %s24 = sphi 0, %s38
      %s25 = sphi 0, %s34
      %s26 = sphi 0, %s23
      %s27 = sphi 0, %s24
      %s28 = sphi 0, %s25
      %s29 = sphi 0, %s26
      %s30 = sphi 0, %s27
      %s31 = sphi 0, %s28
      %s51 = sphi 0, %s53
      %s54 = sphi 0, %s51
      %s55 = sphi 0, %s54
      %s71 = sphi 0, %s55
      %s77 = sphi 0, %s79
      %s80 = sphi 0, %s77
      %s81 = sphi 0, %s80
      %s97 = sphi 0, %s81
      %s103 = sphi 0, %s105
      %s106 = sphi 0, %s103
      %s107 = sphi 0, %s106
      %s123 = sphi 0, %s107
      %s131 = sphi 0, %s133
      %s134 = sphi 0, %s131
      %s135 = sphi 0, %s134
      %s151 = sphi 0, %s135
    $region4: #{tpu_custom_call.1} parent=1 // loop_header_branch
      %19 = sbr.rel (%p17) target = $region8
    $region5: #{tpu_custom_call.1} parent=1 // loop_body
      %s21 = ssub.s32 %s16, 1
      %s22 = ssub.s32 %s16, 2
      %s32 = sadd.s32 1, %s25
      %p33 = scmp.ge.s32.totalorder %s32, 2
      %s34 = scalar_select %p33, 0, %s32
      %s35 = sadd.s32 1, %s24
      %s36 = scalar_select %p33, %s35, %s24
      %p37 = scmp.ge.s32.totalorder %s36, 1
      %s38 = scalar_select %p37, 0, %s36
      %s39 = sadd.s32 1, %s23
      %s40 = scalar_select %p37, %s39, %s23
      %p41 = scmp.ge.s32.totalorder %s40, 1
      %s42 = scalar_select %p41, 0, %s40
      %s43 = sld [smem:[#allocation4 + %s23]]
      %s44 = sadd.s32 %s43, %s25
      %s45 = sld [smem:[#allocation4 + %s42]]
      %s46 = sadd.s32 %s45, %s34
      %s47 = ssub.s32 %s24, %s38
      %s48 = ssub.s32 %s44, %s46
      %s49 = sor.u32 %s47, %s48
      %p50 = scmp.eq.s32.totalorder %s49, 0
      %s52 = sadd.s32 %s51, 1
      %s53 = scalar_select %p50, %s51, %s52
      %p56 = pneg %p50
      %p57 = scmp.eq.s32.totalorder %s16, 1
      %p58 = por %p56, %p57
      %p59 = scmp.ne.s32.totalorder %s51, %s54
      %p60 = scmp.eq.s32.totalorder %s16, 0
      %p61 = por %p59, %p60
      %p62 = scmp.ne.s32.totalorder %s51, %s54
      %p63 = scmp.eq.s32.totalorder %s21, 1
      %p64 = por %p62, %p63
      %p65 = scmp.ne.s32.totalorder %s54, %s55
      %p66 = scmp.eq.s32.totalorder %s21, 0
      %p67 = por %p65, %p66
      %p68 = scmp.ne.s32.totalorder %s54, %s55
      %p69 = scmp.eq.s32.totalorder %s22, 1
      %p70 = por %p68, %p69
      %p72 = scmp.ne.s32.totalorder %s55, %s71
      %p73 = scmp.eq.s32.totalorder %s22, 0
      %p74 = por %p72, %p73
      %s75 = ssub.s32 %s23, %s42
      %p76 = scmp.eq.s32.totalorder %s75, 0
      %s78 = sadd.s32 %s77, 1
      %s79 = scalar_select %p76, %s77, %s78
      %p82 = pneg %p76
      %p83 = scmp.eq.s32.totalorder %s16, 1
      %p84 = por %p82, %p83
      %p85 = scmp.ne.s32.totalorder %s77, %s80
      %p86 = scmp.eq.s32.totalorder %s16, 0
      %p87 = por %p85, %p86
      %p88 = scmp.ne.s32.totalorder %s77, %s80
      %p89 = scmp.eq.s32.totalorder %s21, 1
      %p90 = por %p88, %p89
      %p91 = scmp.ne.s32.totalorder %s80, %s81
      %p92 = scmp.eq.s32.totalorder %s21, 0
      %p93 = por %p91, %p92
      %p94 = scmp.ne.s32.totalorder %s80, %s81
      %p95 = scmp.eq.s32.totalorder %s22, 1
      %p96 = por %p94, %p95
      %p98 = scmp.ne.s32.totalorder %s81, %s97
      %p99 = scmp.eq.s32.totalorder %s22, 0
      %p100 = por %p98, %p99
      %s101 = ssub.s32 %s23, %s42
      %p102 = scmp.eq.s32.totalorder %s101, 0
      %s104 = sadd.s32 %s103, 1
      %s105 = scalar_select %p102, %s103, %s104
      %p108 = pneg %p102
      %p109 = scmp.eq.s32.totalorder %s16, 1
      %p110 = por %p108, %p109
      %p111 = scmp.ne.s32.totalorder %s103, %s106
      %p112 = scmp.eq.s32.totalorder %s16, 0
      %p113 = por %p111, %p112
      %p114 = scmp.ne.s32.totalorder %s103, %s106
      %p115 = scmp.eq.s32.totalorder %s21, 1
      %p116 = por %p114, %p115
      %p117 = scmp.ne.s32.totalorder %s106, %s107
      %p118 = scmp.eq.s32.totalorder %s21, 0
      %p119 = por %p117, %p118
      %p120 = scmp.ne.s32.totalorder %s106, %s107
      %p121 = scmp.eq.s32.totalorder %s22, 1
      %p122 = por %p120, %p121
      %p124 = scmp.ne.s32.totalorder %s107, %s123
      %p125 = scmp.eq.s32.totalorder %s22, 0
      %p126 = por %p124, %p125
      %s127 = ssub.s32 %s24, %s38
      %s128 = ssub.s32 %s23, %s42
      %s129 = sor.u32 %s127, %s128
      %p130 = scmp.eq.s32.totalorder %s129, 0
      %s132 = sadd.s32 %s131, 1
      %s133 = scalar_select %p130, %s131, %s132
      %p136 = pneg %p130
      %p137 = scmp.eq.s32.totalorder %s16, 1
      %p138 = por %p136, %p137
      %p139 = scmp.ne.s32.totalorder %s131, %s134
      %p140 = scmp.eq.s32.totalorder %s16, 0
      %p141 = por %p139, %p140
      %p142 = scmp.ne.s32.totalorder %s131, %s134
      %p143 = scmp.eq.s32.totalorder %s21, 1
      %p144 = por %p142, %p143
      %p145 = scmp.ne.s32.totalorder %s134, %s135
      %p146 = scmp.eq.s32.totalorder %s21, 0
      %p147 = por %p145, %p146
      %p148 = scmp.ne.s32.totalorder %s134, %s135
      %p149 = scmp.eq.s32.totalorder %s22, 1
      %p150 = por %p148, %p149
      %p152 = scmp.ne.s32.totalorder %s135, %s151
      %p153 = scmp.eq.s32.totalorder %s22, 0
      %p154 = por %p152, %p153
      %p155 = scmp.le.s32.totalorder 1, %s16
      %p156 = scmp.lt.s32.totalorder %s16, 3
      %p157 = pnand %p155, %p156
      %p158 = pneg %p157
      // Predicated region
      $region9: #{tpu_custom_call.1} parent=5 // pred_check
        _
      $region10: #{tpu_custom_call.1} parent=5 // pred_check_branch
        %160 = sbr.rel (%p157) target = $region12
      $region11: #{tpu_custom_call.1} parent=5 // pred_region
        %s161 = ssub.s32 %s16, 1
        // Predicated region
        $region13: #{tpu_custom_call.1} parent=11 // pred_check
          %p162 = pneg %p93
        $region14: #{tpu_custom_call.1} parent=11 // pred_check_branch
          %164 = sbr.rel (%p162) target = $region16
        $region15: #{tpu_custom_call.1} parent=11 // pred_region
          %s166 = ssub.s32 8192, 8192
          %167 = vsyncadd [#allocation9], %s166
          %s168 = smul.addr %s26, 64
          %s169 = scalar_lea.hbm %s2, %s168
          %s170 = sshll.u32 [#allocation8], 4
          %s171 = int_to_ptr.vmem [resolvable:$true] %s170
          %176 = dma.hbm_to_vmem [thread:$0]  %s169, 8192, %s171, [#allocation9], 64, 64, 4
        $region16: #{tpu_custom_call.1} parent=11 // pred_fallthru
          _
        // Predicated region
        $region17: #{tpu_custom_call.1} parent=11 // pred_check
          %p177 = pneg %p119
        $region18: #{tpu_custom_call.1} parent=11 // pred_check_branch
          %179 = sbr.rel (%p177) target = $region20
        $region19: #{tpu_custom_call.1} parent=11 // pred_region
          %p180 = scmp.lt.s32.totalorder %s26, 0
          %s181 = scalar_select %p180, %s26, 0
          %s182 = scalar_lea.vmem %s3, %s181
        $region20: #{tpu_custom_call.1} parent=11 // pred_fallthru
          _
      $region12: #{tpu_custom_call.1} parent=5 // pred_fallthru
        _
      %p183 = scmp.lt.s32.totalorder %s16, 2
      // Predicated region
      $region21: #{tpu_custom_call.1} parent=5 // pred_check
        %p184 = pneg %p183
      $region22: #{tpu_custom_call.1} parent=5 // pred_check_branch
        %186 = sbr.rel (%p184) target = $region24
      $region23: #{tpu_custom_call.1} parent=5 // pred_region
        // Predicated region
        $region25: #{tpu_custom_call.1} parent=23 // pred_check
          %p187 = pneg %p61
        $region26: #{tpu_custom_call.1} parent=23 // pred_check_branch
          %189 = sbr.rel (%p187) target = $region28
        $region27: #{tpu_custom_call.1} parent=23 // pred_region
          %s190 = sand.u32 %s51, 1
          %s191 = scalar_lea.sflag [#allocation6], %s190
          %s192 = sand.u32 %s51, 1
          %s193 = smul.addr %s192, 32
          %s194 = scalar_lea.vmem [#allocation5], %s193
          %s195 = sld [smem:[#allocation4 + %s23]]
          %s196 = sadd.s32 %s195, %s25
          %s197 = smul.u32 4, %s24
          %s198 = smul.u32 4, %s196
          %s199 = ssub.s32 1, %s197
          %s200 = smul.u32 32, %s199
          %s201 = smul.u32 %s200, 4
          %s203 = ssub.s32 512, %s201
          %204 = vsyncadd %s191, %s203
          %p205 = scmp.ne.s32.totalorder 0, %s201
          %s206 = smul.addr %s197, 8
          %s207 = sadd.s32 %s198, %s206
          %s208 = smul.addr %s207, 32
          %s209 = scalar_lea.hbm %s1, %s208
          %s210 = smul.u32 8, %s199
          %s211 = sshll.u32 %s194, 4
          %s212 = int_to_ptr.vmem [resolvable:$true] %s211
          %s213 = sshll.u32 %s210, 4
          %217 = dma.hbm_to_vmem [thread:$0]  (%p205), %s209, %s213, %s212, %s191, 256, 128, 8
        $region28: #{tpu_custom_call.1} parent=23 // pred_fallthru
          _
      $region24: #{tpu_custom_call.1} parent=5 // pred_fallthru
        _
      %p218 = scmp.le.s32.totalorder 1, %s16
      %p219 = scmp.lt.s32.totalorder %s16, 3
      %p220 = pnand %p218, %p219
      %p221 = pneg %p220
      // Predicated region
      $region29: #{tpu_custom_call.1} parent=5 // pred_check
        _
      $region30: #{tpu_custom_call.1} parent=5 // pred_check_branch
        %223 = sbr.rel (%p220) target = $region32
      $region31: #{tpu_custom_call.1} parent=5 // pred_region
        %s224 = ssub.s32 %s16, 1
        %s225 = sand.u32 %s54, 1
        %s226 = scalar_lea.sflag [#allocation6], %s225
        %s227 = sand.u32 %s54, 1
        %s228 = smul.addr %s227, 32
        %s229 = scalar_lea.vmem [#allocation5], %s228
        // Predicated region
        $region33: #{tpu_custom_call.1} parent=31 // pred_check
          %p230 = pneg %p67
        $region34: #{tpu_custom_call.1} parent=31 // pred_check_branch
          %232 = sbr.rel (%p230) target = $region36
        $region35: #{tpu_custom_call.1} parent=31 // pred_region
          %233 = dma.done %s226, 512
        $region36: #{tpu_custom_call.1} parent=31 // pred_fallthru
          _
        // Predicated region
        $region37: #{tpu_custom_call.1} parent=31 // pred_check
          %p234 = pneg %p93
        $region38: #{tpu_custom_call.1} parent=31 // pred_check_branch
          %236 = sbr.rel (%p234) target = $region40
        $region39: #{tpu_custom_call.1} parent=31 // pred_region
          %237 = dma.done [#allocation9], 8192
        $region40: #{tpu_custom_call.1} parent=31 // pred_fallthru
          _
        %s238 = sand.u32 %s54, 1
        %s239 = scalar_lea.sflag [#allocation6], %s238
        %s240 = sand.u32 %s54, 1
        %s241 = smul.addr %s240, 32
        %s242 = scalar_lea.vmem [#allocation5], %s241
        %p243 = pneg %p67
        %p244 = pneg %p64
        %p245 = pneg %p93
        %p246 = pneg %p90
        %p247 = scmp.lt.s32.totalorder %s26, 0
        %s248 = scalar_select %p247, %s26, 0
        %s249 = scalar_lea.vmem %s3, %s248
        %p250 = pneg %p119
        %p251 = pneg %p116
        %p252 = pneg %p147
        %p253 = pneg %p144
        %s254 = sld [smem:[#allocation4 + %s26]]
        %s255 = sadd.s32 %s254, %s28
        %s256 = smul.u32 4, %s27
        %s257 = smul.u32 4, %s255
        %s258 = ssub.s32 1, %s256
        %s259 = smul.u32 32, %s258
        %s260 = smul.u32 %s259, 4
        %p261 = scmp.lt.s32.totalorder %s26, 0
        %s262 = scalar_select %p261, %s26, 0
        %s263 = scalar_lea.vmem %s3, %s262
        %s264 = smul.u32 4, %s27
        %s265 = ssub.s32 1, %s264
        %s266 = smul.u32 32, %s265
        %p267 = scmp.eq.s32.totalorder %s28, 0
        // Predicated region
        $region41: #{tpu_custom_call.1} parent=31 // pred_check
          %p268 = pneg %p267
        $region42: #{tpu_custom_call.1} parent=31 // pred_check_branch
          %270 = sbr.rel (%p268) target = $region44
        $region43: #{tpu_custom_call.1} parent=31 // pred_region
          %271 = vst [vmem:[#allocation2] sm:$0xff] 0.0
        $region44: #{tpu_custom_call.1} parent=31 // pred_fallthru
          _
        %v272 = vld [vmem:[%s229] sm:$0xff]
        %v273 = vld [vmem:[%s229 + $0x8] sm:$0xff]
        %v274 = vld [vmem:[%s229 + $0x10] sm:$0xff]
        %v275 = vld [vmem:[%s229 + $0x18] sm:$0xff]
        %s276 = sld [smem:[#allocation4 + %s26]]
        %s277 = sadd.s32 %s276, %s28
        %s278 = smul.u32 %s277, 512
        %s279 = sshra.s32 %s278, 3
        %s280 = sand.u32 %s278, 7
        %s281 = smul.addr %s279, 4
        %s282 = scalar_lea.vmem [#allocation8], %s281
        %v283 = vld [vmem:[%s282] sm:$0xf]
        %v284 = vld [vmem:[%s282 + $0x4] sm:$0xf]
        %v285 = vld [vmem:[%s282 + $0x8] sm:$0xf]
        %v286 = vld [vmem:[%s282 + $0xc] sm:$0xf]
        %v287 = vld [vmem:[%s282 + $0x10] sm:$0xf]
        %v288 = vld [vmem:[%s282 + $0x14] sm:$0xf]
        %v289 = vld [vmem:[%s282 + $0x18] sm:$0xf]
        %v290 = vld [vmem:[%s282 + $0x1c] sm:$0xf]
        %v291 = vld [vmem:[%s282 + $0x20] sm:$0xf]
        %v292 = vld [vmem:[%s282 + $0x24] sm:$0xf]
        %v293 = vld [vmem:[%s282 + $0x28] sm:$0xf]
        %v294 = vld [vmem:[%s282 + $0x2c] sm:$0xf]
        %v295 = vld [vmem:[%s282 + $0x30] sm:$0xf]
        %v296 = vld [vmem:[%s282 + $0x34] sm:$0xf]
        %v297 = vld [vmem:[%s282 + $0x38] sm:$0xf]
        %v298 = vld [vmem:[%s282 + $0x3c] sm:$0xf]
        %v299 = vld [vmem:[%s282 + $0x40] sm:$0xf]
        %v300 = vld [vmem:[%s282 + $0x44] sm:$0xf]
        %v301 = vld [vmem:[%s282 + $0x48] sm:$0xf]
        %v302 = vld [vmem:[%s282 + $0x4c] sm:$0xf]
        %v303 = vld [vmem:[%s282 + $0x50] sm:$0xf]
        %v304 = vld [vmem:[%s282 + $0x54] sm:$0xf]
        %v305 = vld [vmem:[%s282 + $0x58] sm:$0xf]
        %v306 = vld [vmem:[%s282 + $0x5c] sm:$0xf]
        %v307 = vld [vmem:[%s282 + $0x60] sm:$0xf]
        %v308 = vld [vmem:[%s282 + $0x64] sm:$0xf]
        %v309 = vld [vmem:[%s282 + $0x68] sm:$0xf]
        %v310 = vld [vmem:[%s282 + $0x6c] sm:$0xf]
        %v311 = vld [vmem:[%s282 + $0x70] sm:$0xf]
        %v312 = vld [vmem:[%s282 + $0x74] sm:$0xf]
        %v313 = vld [vmem:[%s282 + $0x78] sm:$0xf]
        %v314 = vld [vmem:[%s282 + $0x7c] sm:$0xf]
        %v315 = vld [vmem:[%s282 + $0x80] sm:$0xf]
        %v316 = vld [vmem:[%s282 + $0x84] sm:$0xf]
        %v317 = vld [vmem:[%s282 + $0x88] sm:$0xf]
        %v318 = vld [vmem:[%s282 + $0x8c] sm:$0xf]
        %v319 = vld [vmem:[%s282 + $0x90] sm:$0xf]
        %v320 = vld [vmem:[%s282 + $0x94] sm:$0xf]
        %v321 = vld [vmem:[%s282 + $0x98] sm:$0xf]
        %v322 = vld [vmem:[%s282 + $0x9c] sm:$0xf]
        %v323 = vld [vmem:[%s282 + $0xa0] sm:$0xf]
        %v324 = vld [vmem:[%s282 + $0xa4] sm:$0xf]
        %v325 = vld [vmem:[%s282 + $0xa8] sm:$0xf]
        %v326 = vld [vmem:[%s282 + $0xac] sm:$0xf]
        %v327 = vld [vmem:[%s282 + $0xb0] sm:$0xf]
        %v328 = vld [vmem:[%s282 + $0xb4] sm:$0xf]
        %v329 = vld [vmem:[%s282 + $0xb8] sm:$0xf]
        %v330 = vld [vmem:[%s282 + $0xbc] sm:$0xf]
        %v331 = vld [vmem:[%s282 + $0xc0] sm:$0xf]
        %v332 = vld [vmem:[%s282 + $0xc4] sm:$0xf]
        %v333 = vld [vmem:[%s282 + $0xc8] sm:$0xf]
        %v334 = vld [vmem:[%s282 + $0xcc] sm:$0xf]
        %v335 = vld [vmem:[%s282 + $0xd0] sm:$0xf]
        %v336 = vld [vmem:[%s282 + $0xd4] sm:$0xf]
        %v337 = vld [vmem:[%s282 + $0xd8] sm:$0xf]
        %v338 = vld [vmem:[%s282 + $0xdc] sm:$0xf]
        %v339 = vld [vmem:[%s282 + $0xe0] sm:$0xf]
        %v340 = vld [vmem:[%s282 + $0xe4] sm:$0xf]
        %v341 = vld [vmem:[%s282 + $0xe8] sm:$0xf]
        %v342 = vld [vmem:[%s282 + $0xec] sm:$0xf]
        %v343 = vld [vmem:[%s282 + $0xf0] sm:$0xf]
        %v344 = vld [vmem:[%s282 + $0xf4] sm:$0xf]
        %v345 = vld [vmem:[%s282 + $0xf8] sm:$0xf]
        %v346 = vld [vmem:[%s282 + $0xfc] sm:$0xf]
        %v347 = vld [vmem:[#allocation2] sm:$0xff]
        %v348 = vunpack.c.l.bf16 %v283
        %v349 = vunpack.c.l.bf16 %v284
        %v350 = vunpack.c.l.bf16 %v285
        %v351 = vunpack.c.l.bf16 %v286
        %v352 = vunpack.c.l.bf16 %v287
        %v353 = vunpack.c.l.bf16 %v288
        %v354 = vunpack.c.l.bf16 %v289
        %v355 = vunpack.c.l.bf16 %v290
        %v356 = vunpack.c.l.bf16 %v291
        %v357 = vunpack.c.l.bf16 %v292
        %v358 = vunpack.c.l.bf16 %v293
        %v359 = vunpack.c.l.bf16 %v294
        %v360 = vunpack.c.l.bf16 %v295
        %v361 = vunpack.c.l.bf16 %v296
        %v362 = vunpack.c.l.bf16 %v297
        %v363 = vunpack.c.l.bf16 %v298
        %v364 = vunpack.c.l.bf16 %v299
        %v365 = vunpack.c.l.bf16 %v300
        %v366 = vunpack.c.l.bf16 %v301
        %v367 = vunpack.c.l.bf16 %v302
        %v368 = vunpack.c.l.bf16 %v303
        %v369 = vunpack.c.l.bf16 %v304
        %v370 = vunpack.c.l.bf16 %v305
        %v371 = vunpack.c.l.bf16 %v306
        %v372 = vunpack.c.l.bf16 %v307
        %v373 = vunpack.c.l.bf16 %v308
        %v374 = vunpack.c.l.bf16 %v309
        %v375 = vunpack.c.l.bf16 %v310
        %v376 = vunpack.c.l.bf16 %v311
        %v377 = vunpack.c.l.bf16 %v312
        %v378 = vunpack.c.l.bf16 %v313
        %v379 = vunpack.c.l.bf16 %v314
        %v380 = vunpack.c.l.bf16 %v315
        %v381 = vunpack.c.l.bf16 %v316
        %v382 = vunpack.c.l.bf16 %v317
        %v383 = vunpack.c.l.bf16 %v318
        %v384 = vunpack.c.l.bf16 %v319
        %v385 = vunpack.c.l.bf16 %v320
        %v386 = vunpack.c.l.bf16 %v321
        %v387 = vunpack.c.l.bf16 %v322
        %v388 = vunpack.c.l.bf16 %v323
        %v389 = vunpack.c.l.bf16 %v324
        %v390 = vunpack.c.l.bf16 %v325
        %v391 = vunpack.c.l.bf16 %v326
        %v392 = vunpack.c.l.bf16 %v327
        %v393 = vunpack.c.l.bf16 %v328
        %v394 = vunpack.c.l.bf16 %v329
        %v395 = vunpack.c.l.bf16 %v330
        %v396 = vunpack.c.l.bf16 %v331
        %v397 = vunpack.c.l.bf16 %v332
        %v398 = vunpack.c.l.bf16 %v333
        %v399 = vunpack.c.l.bf16 %v334
        %v400 = vunpack.c.l.bf16 %v335
        %v401 = vunpack.c.l.bf16 %v336
        %v402 = vunpack.c.l.bf16 %v337
        %v403 = vunpack.c.l.bf16 %v338
        %v404 = vunpack.c.l.bf16 %v339
        %v405 = vunpack.c.l.bf16 %v340
        %v406 = vunpack.c.l.bf16 %v341
        %v407 = vunpack.c.l.bf16 %v342
        %v408 = vunpack.c.l.bf16 %v343
        %v409 = vunpack.c.l.bf16 %v344
        %v410 = vunpack.c.l.bf16 %v345
        %v411 = vunpack.c.l.bf16 %v346
        %v416 = vcombine.low %v272, %v273
        %v417 = vcombine.high %v272, %v273
        %v418 = vcombine.low %v274, %v275
        %v419 = vcombine.high %v274, %v275
        %v421 = vunpack.c.l.s4 1983009808
        %v422 = vunpack.c.0.s8 %v421
        %v423 = vlaneseq
        %v424 = vshrl.u32 %v423, 7
        %v425 = vsub.s32 %v422, %v424
        %v426 = vrot.slane %v416, %v425
        %v428 = vunpack.c.l.s4 1983009808
        %v429 = vunpack.c.0.s8 %v428
        %v430 = vlaneseq
        %v431 = vshrl.u32 %v430, 7
        %v432 = vsub.s32 %v429, %v431
        %v433 = vrot.slane %v417, %v432
        %v435 = vunpack.c.l.s4 1983009808
        %v436 = vunpack.c.0.s8 %v435
        %v437 = vlaneseq
        %v438 = vshrl.u32 %v437, 7
        %v439 = vsub.s32 %v436, %v438
        %v440 = vrot.slane %v418, %v439
        %v442 = vunpack.c.l.s4 1983009808
        %v443 = vunpack.c.0.s8 %v442
        %v444 = vlaneseq
        %v445 = vshrl.u32 %v444, 7
        %v446 = vsub.s32 %v443, %v445
        %v447 = vrot.slane %v419, %v446
        %v448 = vcombine.low %v426, %v440
        %v449 = vcombine.high %v426, %v440
        %v450 = vcombine.low %v433, %v447
        %v451 = vcombine.high %v433, %v447
        %456 = vmatprep.subr.mxu0 0.0
        %457 = vmatpush1.msra.mxu0 %v348
        %458 = vmatprep.subr.mxu0 0.0
        %459 = vmatpush1.msra.mxu0 %v349
        %460 = vmatprep.subr.mxu0 0.0
        %461 = vmatpush1.msra.mxu0 %v350
        %462 = vmatprep.subr.mxu0 0.0
        %463 = vmatpush1.msra.mxu0 %v351
        %464 = vmatprep.subr.mxu0 0.0
        %465 = vmatpush1.msra.mxu0 %v352
        %466 = vmatprep.subr.mxu0 0.0
        %467 = vmatpush1.msra.mxu0 %v353
        %468 = vmatprep.subr.mxu0 0.0
        %469 = vmatpush1.msra.mxu0 %v354
        %470 = vmatprep.subr.mxu0 0.0
        %471 = vmatpush1.msra.mxu0 %v355
        %472 = vmatprep.subr.mxu0 0.0
        %473 = vmatpush1.msra.mxu0 %v356
        %474 = vmatprep.subr.mxu0 0.0
        %475 = vmatpush1.msra.mxu0 %v357
        %476 = vmatprep.subr.mxu0 0.0
        %477 = vmatpush1.msra.mxu0 %v358
        %478 = vmatprep.subr.mxu0 0.0
        %479 = vmatpush1.msra.mxu0 %v359
        %480 = vmatprep.subr.mxu0 0.0
        %481 = vmatpush1.msra.mxu0 %v360
        %482 = vmatprep.subr.mxu0 0.0
        %483 = vmatpush1.msra.mxu0 %v361
        %484 = vmatprep.subr.mxu0 0.0
        %485 = vmatpush1.msra.mxu0 %v362
        %486 = vmatprep.subr.mxu0 0.0
        %487 = vmatpush1.msra.mxu0 %v363
        %488 = vmatprep.subr.mxu0 0.0
        %489 = vmatpush1.msra.mxu0 %v364
        %490 = vmatprep.subr.mxu0 0.0
        %491 = vmatpush1.msra.mxu0 %v365
        %492 = vmatprep.subr.mxu0 0.0
        %493 = vmatpush1.msra.mxu0 %v366
        %494 = vmatprep.subr.mxu0 0.0
        %495 = vmatpush1.msra.mxu0 %v367
        %496 = vmatprep.subr.mxu0 0.0
        %497 = vmatpush1.msra.mxu0 %v368
        %498 = vmatprep.subr.mxu0 0.0
        %499 = vmatpush1.msra.mxu0 %v369
        %500 = vmatprep.subr.mxu0 0.0
        %501 = vmatpush1.msra.mxu0 %v370
        %502 = vmatprep.subr.mxu0 0.0
        %503 = vmatpush1.msra.mxu0 %v371
        %504 = vmatprep.subr.mxu0 0.0
        %505 = vmatpush1.msra.mxu0 %v372
        %506 = vmatprep.subr.mxu0 0.0
        %507 = vmatpush1.msra.mxu0 %v373
        %508 = vmatprep.subr.mxu0 0.0
        %509 = vmatpush1.msra.mxu0 %v374
        %510 = vmatprep.subr.mxu0 0.0
        %511 = vmatpush1.msra.mxu0 %v375
        %512 = vmatprep.subr.mxu0 0.0
        %513 = vmatpush1.msra.mxu0 %v376
        %514 = vmatprep.subr.mxu0 0.0
        %515 = vmatpush1.msra.mxu0 %v377
        %516 = vmatprep.subr.mxu0 0.0
        %517 = vmatpush1.msra.mxu0 %v378
        %518 = vmatprep.subr.mxu0 0.0
        %519 = vmatpush1.msra.mxu0 %v379
        %520 = vmatprep.mubr.f32.mxu0 %v449
        %521 = vmatmul.mubr.f32.gmra.mrb[0].mxu0 %v448
        %v522 = vpop.f32.mrb[0].mxu0
        %v523 = vadd.f32 0.0, %v522
        %v524 = vpop.f32.mrb[0].mxu0
        %525 = vdwg.mxu0
        %526 = vmatprep.subr.mxu0 0.0
        %527 = vmatpush1.msra.mxu0 %v380
        %528 = vmatprep.subr.mxu0 0.0
        %529 = vmatpush1.msra.mxu0 %v381
        %530 = vmatprep.subr.mxu0 0.0
        %531 = vmatpush1.msra.mxu0 %v382
        %532 = vmatprep.subr.mxu0 0.0
        %533 = vmatpush1.msra.mxu0 %v383
        %534 = vmatprep.subr.mxu0 0.0
        %535 = vmatpush1.msra.mxu0 %v384
        %536 = vmatprep.subr.mxu0 0.0
        %537 = vmatpush1.msra.mxu0 %v385
        %538 = vmatprep.subr.mxu0 0.0
        %539 = vmatpush1.msra.mxu0 %v386
        %540 = vmatprep.subr.mxu0 0.0
        %541 = vmatpush1.msra.mxu0 %v387
        %542 = vmatprep.subr.mxu0 0.0
        %543 = vmatpush1.msra.mxu0 %v388
        %544 = vmatprep.subr.mxu0 0.0
        %545 = vmatpush1.msra.mxu0 %v389
        %546 = vmatprep.subr.mxu0 0.0
        %547 = vmatpush1.msra.mxu0 %v390
        %548 = vmatprep.subr.mxu0 0.0
        %549 = vmatpush1.msra.mxu0 %v391
        %550 = vmatprep.subr.mxu0 0.0
        %551 = vmatpush1.msra.mxu0 %v392
        %552 = vmatprep.subr.mxu0 0.0
        %553 = vmatpush1.msra.mxu0 %v393
        %554 = vmatprep.subr.mxu0 0.0
        %555 = vmatpush1.msra.mxu0 %v394
        %556 = vmatprep.subr.mxu0 0.0
        %557 = vmatpush1.msra.mxu0 %v395
        %558 = vmatprep.subr.mxu0 0.0
        %559 = vmatpush1.msra.mxu0 %v396
        %560 = vmatprep.subr.mxu0 0.0
        %561 = vmatpush1.msra.mxu0 %v397
        %562 = vmatprep.subr.mxu0 0.0
        %563 = vmatpush1.msra.mxu0 %v398
        %564 = vmatprep.subr.mxu0 0.0
        %565 = vmatpush1.msra.mxu0 %v399
        %566 = vmatprep.subr.mxu0 0.0
        %567 = vmatpush1.msra.mxu0 %v400
        %568 = vmatprep.subr.mxu0 0.0
        %569 = vmatpush1.msra.mxu0 %v401
        %570 = vmatprep.subr.mxu0 0.0
        %571 = vmatpush1.msra.mxu0 %v402
        %572 = vmatprep.subr.mxu0 0.0
        %573 = vmatpush1.msra.mxu0 %v403
        %574 = vmatprep.subr.mxu0 0.0
        %575 = vmatpush1.msra.mxu0 %v404
        %576 = vmatprep.subr.mxu0 0.0
        %577 = vmatpush1.msra.mxu0 %v405
        %578 = vmatprep.subr.mxu0 0.0
        %579 = vmatpush1.msra.mxu0 %v406
        %580 = vmatprep.subr.mxu0 0.0
        %581 = vmatpush1.msra.mxu0 %v407
        %582 = vmatprep.subr.mxu0 0.0
        %583 = vmatpush1.msra.mxu0 %v408
        %584 = vmatprep.subr.mxu0 0.0
        %585 = vmatpush1.msra.mxu0 %v409
        %586 = vmatprep.subr.mxu0 0.0
        %587 = vmatpush1.msra.mxu0 %v410
        %588 = vmatprep.subr.mxu0 0.0
        %589 = vmatpush1.msra.mxu0 %v411
        %590 = vmatprep.mubr.f32.mxu0 %v451
        %591 = vmatmul.mubr.f32.gmra.mrb[0].mxu0 %v450
        %v592 = vpop.f32.mrb[0].mxu0
        %v593 = vadd.f32 %v523, %v592
        %v594 = vpop.f32.mrb[0].mxu0
        %595 = vdwg.mxu0
        %v596 = vadd.f32 %v347, %v593
        %597 = vst [vmem:[#allocation2] sm:$0xff] %v596
        %p598 = scmp.eq.s32.totalorder %s28, 1
        // Predicated region
        $region45: #{tpu_custom_call.1} parent=31 // pred_check
          %p599 = pneg %p598
        $region46: #{tpu_custom_call.1} parent=31 // pred_check_branch
          %601 = sbr.rel (%p599) target = $region48
        $region47: #{tpu_custom_call.1} parent=31 // pred_region
          %v602 = vld [vmem:[#allocation2] sm:$0xff]
          %v603 = vld [vmem:[%s263] sm:$0x1]
          %v605 = vlaneseq
          %v606 = vshrl.u32 %v605, 7
          %v607 = vsub.s32 0, %v606
          %v608 = vrot.slane %v603, %v607
          %v610 = vmul.f32 %v602, %v608
          %611 = vst [vmem:[#allocation10] sm:$0xff] %v610
        $region48: #{tpu_custom_call.1} parent=31 // pred_fallthru
          _
        // Predicated region
        $region49: #{tpu_custom_call.1} parent=31 // pred_check
          %p612 = pneg %p144
        $region50: #{tpu_custom_call.1} parent=31 // pred_check_branch
          %614 = sbr.rel (%p612) target = $region52
        $region51: #{tpu_custom_call.1} parent=31 // pred_region
          %s615 = smul.u32 4, %s27
          %s616 = ssub.s32 1, %s615
          %s617 = smul.u32 32, %s616
          %s619 = ssub.s32 128, %s617
          %620 = vsyncadd [#allocation7], %s619
          %p621 = scmp.ne.s32.totalorder 0, %s617
          %s622 = sadd.s32 %s26, %s615
          %s623 = smul.addr %s622, 32
          %s624 = scalar_lea.hbm %s4, %s623
          %s625 = smul.u32 2, %s616
          %s626 = sshll.u32 [#allocation10], 4
          %s627 = int_to_ptr.vmem [resolvable:$true] %s626
          %s628 = sshll.u32 %s625, 4
          %632 = dma.vmem_to_hbm [thread:$0]  (%p621), %s627, %s628, %s624, [#allocation7], 32, 32, 2
        $region52: #{tpu_custom_call.1} parent=31 // pred_fallthru
          _
        // Predicated region
        $region53: #{tpu_custom_call.1} parent=31 // pred_check
          %p633 = pneg %p144
        $region54: #{tpu_custom_call.1} parent=31 // pred_check_branch
          %635 = sbr.rel (%p633) target = $region56
        $region55: #{tpu_custom_call.1} parent=31 // pred_region
          %636 = dma.done [#allocation7], 128
        $region56: #{tpu_custom_call.1} parent=31 // pred_fallthru
          _
      $region32: #{tpu_custom_call.1} parent=5 // pred_fallthru
        _
      %p637 = scmp.le.s32.totalorder 2, %s16
      // Predicated region
      $region57: #{tpu_custom_call.1} parent=5 // pred_check
        %p638 = pneg %p637
      $region58: #{tpu_custom_call.1} parent=5 // pred_check_branch
        %640 = sbr.rel (%p638) target = $region60
      $region59: #{tpu_custom_call.1} parent=5 // pred_region
        %s641 = ssub.s32 %s16, 2
      $region60: #{tpu_custom_call.1} parent=5 // pred_fallthru
        _
    $region6: #{tpu_custom_call.1} parent=1 // loop_footer
      %s20 = sadd.s32 1, %s16
    $region7: #{tpu_custom_call.1} parent=1 // loop_footer_branch
      %15 = sbr.rel target = $region3
    $region8: #{tpu_custom_call.1} parent=1 // loop_exit
      _
    %642 = vsyncpa [#allocation6], 1
    %s643 = scalar_lea.sflag [#allocation6], 1
    %644 = vsyncpa %s643, 1
    %645 = vsyncpa [#allocation9], 1
    %646 = vsyncpa [#allocation7], 1
    %s647 = scalar_lea.sflag [#allocation7], 1
    %648 = vsyncpa %s647, 1

</llo_original>
